<compile_context>
chip_gen: v7x
topology: tpu7x:2x2x1
jax: 0.10.0
libtpu: 0.0.40
codegen_flags: <defaults>
</compile_context>

<pallas_src>
import functools

import jax
import jax.numpy as jnp
from jax.experimental import pallas as pl
from jax.experimental.pallas import tpu as pltpu


def _round_up(v, m):
    return ((v + m - 1) // m) * m


def _vmem_capacity_bytes():
    """Per-core VMEM capacity (64 MiB on v7x, 128 MiB on v5e/v6e)."""
    try:
        return int(pltpu.get_tpu_info().vmem_capacity_bytes)
    except Exception:  # not on TPU / API unavailable -> conservative default
        return 64 << 20


def _se_kernel(x_ref, w1t_ref, b1_ref, w2_ref, b2_ref, o_ref, *, inv_hw):
    """Fused SE forward for a block of Nb images.

    x_ref  : (Nb, C, HW)  input slab (true HW extent; lane tail masked by Mosaic)
    w1t_ref: (C, Cmid)    fc1 weight, transposed
    b1_ref : (1, Cmid)    fc1 bias (row)
    w2_ref : (C, Cmid)    fc2 weight
    b2_ref : (1, C)       fc2 bias (row)
    o_ref  : (Nb, C, HW)  output slab
    """
    x = x_ref[...]
    xf = x.astype(jnp.float32)

    # Global average pool over the spatial lanes (reduction is masked to the
    # logical HW extent, so no wrapper-side zero padding is needed).
    pooled = jnp.sum(xf, axis=-1) * inv_hw                                # (Nb, C)

    # fc1 (1x1 conv) on the VPU/XLU: broadcast-multiply + sublane reduce.
    # The FCs are a few K MACs per image; keep them off the MXU — the kernel
    # is HBM-DMA bound and the VPU/XLU/EUP slots have ample slack.
    t1 = jnp.sum(pooled[:, :, None] * w1t_ref[...][None, :, :], axis=1)
    t1 = t1 + b1_ref[...]                                                 # (Nb, Cmid)
    s1 = jnp.maximum(t1, 0.0)                                             # ReLU

    # fc2 (1x1 conv): broadcast the (Nb, Cmid) rows over w2's lanes, lane reduce.
    t2 = jnp.sum(s1[:, None, :] * w2_ref[...][None, :, :], axis=-1)
    t2 = t2 + b2_ref[...]                                                 # (Nb, C)
    gate = jax.nn.sigmoid(t2)                                             # EUP

    # Channel-wise rescale; single contiguous lane-dense store.
    o_ref[...] = (xf * gate[:, :, None]).astype(o_ref.dtype)


def se_module_ref(x, w1, b1, w2, b2):
    """Pure-JAX reference mirroring the PyTorch forward."""
    pooled = x.mean(axis=(2, 3), keepdims=True)                           # (N,C,1,1)
    s = jnp.einsum('oc,ncij->noij', w1, pooled) + b1[None, :, None, None]
    s = jnp.maximum(s, 0.0)
    s = jnp.einsum('oc,ncij->noij', w2, s) + b2[None, :, None, None]
    s = jax.nn.sigmoid(s)
    return x * s


@jax.jit
def se_module(x, w1, b1, w2, b2):
    """x: (N, C, H, W); w1: (Cmid, C); b1: (Cmid,); w2: (C, Cmid); b2: (C,)."""
    N, C, H, W = x.shape
    Cmid = w1.shape[0]
    HW = H * W
    itemsize = x.dtype.itemsize

    # --- static tiling / VMEM budget (all trace-time Python) ---------------
    sub = max(8, 32 // itemsize)              # sublane packing for x's dtype
    Cp, HWp = _round_up(C, sub), _round_up(HW, 128)
    per_img_bytes = Cp * HWp * itemsize       # padded VMEM footprint, 1 image

    # Batch images per grid step so each input DMA moves ~0.5-2 MiB
    # (pipeline sweet spot).  Nb divides N so every block is full.
    target_block_bytes = 2 << 20
    Nb = 1
    for d in range(1, N + 1):
        if N % d == 0 and d * per_img_bytes <= target_block_bytes:
            Nb = d

    block_bytes = Nb * per_img_bytes
    param_bytes = (2 * _round_up(C, 8) * _round_up(Cmid, 128)     # w1t, w2
                   + 8 * _round_up(Cmid, 128)                     # b1 row tile
                   + 8 * _round_up(C, 128)) * 4                   # b2 row tile
    # in + out blocks double-buffered by the pipeline, params resident (x2 conservative).
    vmem_needed = 4 * block_bytes + 2 * param_bytes + (2 << 20)

    vmem_cap = _vmem_capacity_bytes()
    if vmem_needed > vmem_cap - (4 << 20):
        # TODO(synk): two-pass HW-tiled Pallas path (tiled pool kernel + tiny
        # JAX FCs + tiled scale kernel) for slabs exceeding per-core VMEM
        # (relevant on v7x's 64 MiB); fall back to plain XLA for now.
        return se_module_ref(x, w1, b1, w2, b2)

    vmem_bytes = int(min(max(vmem_needed, 8 << 20), vmem_cap - (4 << 20)))

    # --- launch -------------------------------------------------------------
    # No pad/slice of x (blocks use the true HW extent -> exactly 1R + 1W of x
    # over HBM) and no input/output aliasing (x is a non-donated jit argument,
    # so aliasing would only buy a defensive copy).
    x_flat = x.reshape(N, C, HW)
    w1t = w1.T.astype(jnp.float32)                     # (C, Cmid)
    b1_row = b1.reshape(1, Cmid).astype(jnp.float32)
    w2_f = w2.astype(jnp.float32)                      # (C, Cmid)
    b2_row = b2.reshape(1, C).astype(jnp.float32)

    kernel = functools.partial(_se_kernel, inv_hw=1.0 / HW)

    out_flat = pl.pallas_call(
        kernel,
        out_shape=jax.ShapeDtypeStruct((N, C, HW), x.dtype),
        grid_spec=pltpu.PrefetchScalarGridSpec(
            num_scalar_prefetch=0,
            grid=(N // Nb,),
            in_specs=[
                pl.BlockSpec((Nb, C, HW), lambda n: (n, 0, 0)),
                pl.BlockSpec((C, Cmid), lambda n: (0, 0)),
                pl.BlockSpec((1, Cmid), lambda n: (0, 0)),
                pl.BlockSpec((C, Cmid), lambda n: (0, 0)),
                pl.BlockSpec((1, C), lambda n: (0, 0)),
            ],
            out_specs=pl.BlockSpec((Nb, C, HW), lambda n: (n, 0, 0)),
        ),
        compiler_params=pltpu.CompilerParams(
            dimension_semantics=("parallel",),
            vmem_limit_bytes=vmem_bytes,
        ),
    )(x_flat, w1t, b1_row, w2_f, b2_row)

    return out_flat.reshape(N, C, H, W)


if __name__ == "__main__":
    # Small shapes consistent with SEModule(channels=4, reduction=2).
    N, C, H, W = 2, 4, 16, 16
    reduction = 2
    Cmid = C // reduction

    key = jax.random.PRNGKey(0)
    kx, kw1, kb1, kw2, kb2, kx2 = jax.random.split(key, 6)

    x = jax.random.normal(kx, (N, C, H, W), dtype=jnp.float32)
    # Deterministic synthetic parameters (Conv2d 1x1 weights flattened to 2D).
    w1 = jax.random.normal(kw1, (Cmid, C), dtype=jnp.float32) * 0.5
    b1 = jax.random.normal(kb1, (Cmid,), dtype=jnp.float32) * 0.1
    w2 = jax.random.normal(kw2, (C, Cmid), dtype=jnp.float32) * 0.5
    b2 = jax.random.normal(kb2, (C,), dtype=jnp.float32) * 0.1

    out = jax.block_until_ready(se_module(x, w1, b1, w2, b2))
    ref = se_module_ref(x, w1, b1, w2, b2)
    assert out.shape == (N, C, H, W)
    assert jnp.allclose(out, ref, atol=1e-5, rtol=1e-5), "mismatch vs reference (16x16)"

    # Ragged-spatial check: HW = 49 is not a multiple of 128, exercising the
    # unpadded lane-tail masking in the pooled sum and the scaled store.
    x2 = jax.random.normal(kx2, (3, C, 7, 7), dtype=jnp.float32)
    out2 = jax.block_until_ready(se_module(x2, w1, b1, w2, b2))
    ref2 = se_module_ref(x2, w1, b1, w2, b2)
    assert jnp.allclose(out2, ref2, atol=1e-5, rtol=1e-5), "mismatch vs reference (7x7)"

    print("KERNEL_OK")
</pallas_src>

<mosaic_0001>
module attributes {stable_mosaic.version = 11 : i64} {
  func.func @_se_kernel(%arg0: i32, %arg1: memref<2x4x256xf32, #tpu.memory_space<vmem>>, %arg2: memref<4x2xf32, #tpu.memory_space<vmem>>, %arg3: memref<1x2xf32, #tpu.memory_space<vmem>>, %arg4: memref<4x2xf32, #tpu.memory_space<vmem>>, %arg5: memref<1x4xf32, #tpu.memory_space<vmem>>, %arg6: memref<2x4x256xf32, #tpu.memory_space<vmem>>) attributes {dimension_semantics = [#tpu.dimension_semantics<parallel>], iteration_bounds = array<i64: 1>, scalar_prefetch = 0 : i64, scratch_operands = 0 : i64, tpu.core_type = #tpu.core_type<tc>, window_params = [{transform_indices = @transform_0, window_bounds = array<i64: 2, 4, 256>}, {pipeline_mode = #tpu.pipeline_mode<synchronous>, transform_indices = @transform_1, window_bounds = array<i64: 4, 2>}, {pipeline_mode = #tpu.pipeline_mode<synchronous>, transform_indices = @transform_2, window_bounds = array<i64: 1, 2>}, {pipeline_mode = #tpu.pipeline_mode<synchronous>, transform_indices = @transform_3, window_bounds = array<i64: 4, 2>}, {pipeline_mode = #tpu.pipeline_mode<synchronous>, transform_indices = @transform_4, window_bounds = array<i64: 1, 4>}, {transform_indices = @transform_5, window_bounds = array<i64: 2, 4, 256>}]} {
    %c0 = arith.constant 0 : index
    %c0_0 = arith.constant 0 : index
    %c0_1 = arith.constant 0 : index
    %0 = vector.load %arg1[%c0, %c0_0, %c0_1] : memref<2x4x256xf32, #tpu.memory_space<vmem>>, vector<2x4x256xf32>
    %cst = arith.constant dense<0.000000e+00> : vector<2x4xf32>
    %1 = vector.multi_reduction <add>, %0, %cst [2] : vector<2x4x256xf32> to vector<2x4xf32>
    %cst_2 = arith.constant 3.906250e-03 : f32
    %2 = vector.broadcast %cst_2 : f32 to vector<2x4xf32>
    %3 = arith.mulf %1, %2 : vector<2x4xf32>
    %4 = vector.shape_cast %3 : vector<2x4xf32> to vector<2x4x1xf32>
    %c0_3 = arith.constant 0 : index
    %c0_4 = arith.constant 0 : index
    %5 = vector.load %arg2[%c0_3, %c0_4] : memref<4x2xf32, #tpu.memory_space<vmem>>, vector<4x2xf32>
    %6 = vector.shape_cast %5 : vector<4x2xf32> to vector<1x4x2xf32>
    %7 = vector.broadcast %4 : vector<2x4x1xf32> to vector<2x4x2xf32>
    %8 = vector.broadcast %6 : vector<1x4x2xf32> to vector<2x4x2xf32>
    %9 = arith.mulf %7, %8 : vector<2x4x2xf32>
    %cst_5 = arith.constant dense<0.000000e+00> : vector<2x2xf32>
    %10 = vector.multi_reduction <add>, %9, %cst_5 [1] : vector<2x4x2xf32> to vector<2x2xf32>
    %c0_6 = arith.constant 0 : index
    %c0_7 = arith.constant 0 : index
    %11 = vector.load %arg3[%c0_6, %c0_7] : memref<1x2xf32, #tpu.memory_space<vmem>>, vector<1x2xf32>
    %12 = vector.broadcast %11 : vector<1x2xf32> to vector<2x2xf32>
    %13 = arith.addf %10, %12 : vector<2x2xf32>
    %cst_8 = arith.constant 0.000000e+00 : f32
    %14 = vector.broadcast %cst_8 : f32 to vector<2x2xf32>
    %15 = arith.maximumf %13, %14 : vector<2x2xf32>
    %16 = vector.shape_cast %15 : vector<2x2xf32> to vector<2x1x2xf32>
    %c0_9 = arith.constant 0 : index
    %c0_10 = arith.constant 0 : index
    %17 = vector.load %arg4[%c0_9, %c0_10] : memref<4x2xf32, #tpu.memory_space<vmem>>, vector<4x2xf32>
    %18 = vector.shape_cast %17 : vector<4x2xf32> to vector<1x4x2xf32>
    %19 = vector.broadcast %16 : vector<2x1x2xf32> to vector<2x4x2xf32>
    %20 = vector.broadcast %18 : vector<1x4x2xf32> to vector<2x4x2xf32>
    %21 = arith.mulf %19, %20 : vector<2x4x2xf32>
    %cst_11 = arith.constant dense<0.000000e+00> : vector<2x4xf32>
    %22 = vector.multi_reduction <add>, %21, %cst_11 [2] : vector<2x4x2xf32> to vector<2x4xf32>
    %c0_12 = arith.constant 0 : index
    %c0_13 = arith.constant 0 : index
    %23 = vector.load %arg5[%c0_12, %c0_13] : memref<1x4xf32, #tpu.memory_space<vmem>>, vector<1x4xf32>
    %24 = vector.broadcast %23 : vector<1x4xf32> to vector<2x4xf32>
    %25 = arith.addf %22, %24 : vector<2x4xf32>
    %26 = arith.negf %25 : vector<2x4xf32>
    %27 = math.exp %26 : vector<2x4xf32>
    %cst_14 = arith.constant 1.000000e+00 : f32
    %28 = vector.broadcast %cst_14 : f32 to vector<2x4xf32>
    %29 = arith.addf %28, %27 : vector<2x4xf32>
    %30 = arith.divf %28, %29 : vector<2x4xf32>
    %31 = vector.shape_cast %30 : vector<2x4xf32> to vector<2x4x1xf32>
    %32 = vector.broadcast %31 : vector<2x4x1xf32> to vector<2x4x256xf32>
    %33 = arith.mulf %0, %32 : vector<2x4x256xf32>
    %c0_15 = arith.constant 0 : index
    %c0_16 = arith.constant 0 : index
    %c0_17 = arith.constant 0 : index
    %34 = vector.load %arg6[%c0_15, %c0_16, %c0_17] : memref<2x4x256xf32, #tpu.memory_space<vmem>>, vector<2x4x256xf32>
    tpu.vector_store %arg6[%c0_15, %c0_16, %c0_17], %33 {strides = array<i32>} : memref<2x4x256xf32, #tpu.memory_space<vmem>>, vector<2x4x256xf32>,
    return
  }
  func.func @transform_0(%arg0: i32) -> (i32, i32, i32) {
    %c0_i32 = arith.constant 0 : i32
    %c0_i32_0 = arith.constant 0 : i32
    %c0_i32_1 = arith.constant 0 : i32
    return %arg0, %c0_i32, %c0_i32_0 : i32, i32, i32
  }
  func.func @transform_1(%arg0: i32) -> (i32, i32) {
    %c0_i32 = arith.constant 0 : i32
    %c0_i32_0 = arith.constant 0 : i32
    %c0_i32_1 = arith.constant 0 : i32
    return %c0_i32, %c0_i32_0 : i32, i32
  }
  func.func @transform_2(%arg0: i32) -> (i32, i32) {
    %c0_i32 = arith.constant 0 : i32
    %c0_i32_0 = arith.constant 0 : i32
    %c0_i32_1 = arith.constant 0 : i32
    return %c0_i32, %c0_i32_0 : i32, i32
  }
  func.func @transform_3(%arg0: i32) -> (i32, i32) {
    %c0_i32 = arith.constant 0 : i32
    %c0_i32_0 = arith.constant 0 : i32
    %c0_i32_1 = arith.constant 0 : i32
    return %c0_i32, %c0_i32_0 : i32, i32
  }
  func.func @transform_4(%arg0: i32) -> (i32, i32) {
    %c0_i32 = arith.constant 0 : i32
    %c0_i32_0 = arith.constant 0 : i32
    %c0_i32_1 = arith.constant 0 : i32
    return %c0_i32, %c0_i32_0 : i32, i32
  }
  func.func @transform_5(%arg0: i32) -> (i32, i32, i32) {
    %c0_i32 = arith.constant 0 : i32
    %c0_i32_0 = arith.constant 0 : i32
    %c0_i32_1 = arith.constant 0 : i32
    return %arg0, %c0_i32, %c0_i32_0 : i32, i32, i32
  }
}

</mosaic_0001>

<llo_original>
// kernel: se_module.1
$region0: #{se_module.1}
  #allocation0 [shape = 'u32[]', space=smem, size = 0x4, offset = 0x4, fixed_abs, tag = 'smem constant byte address 0x4 - core index']
  #allocation1 [shape = 'u32[144,128]{1,0:T(1,128)}', space=vmem, size = 0x12000, scoped, tag = 'internal scratch']
  %s0 = inlined_call_operand.vmem [shape: f32[2,4,256], index: 0, kind: input, shape index: {}]
  %s1 = inlined_call_operand.vmem [shape: f32[4,2], index: 1, kind: input, shape index: {}]
  %s2 = inlined_call_operand.vmem [shape: f32[1,2], index: 2, kind: input, shape index: {}]
  %s3 = inlined_call_operand.vmem [shape: f32[4,2], index: 3, kind: input, shape index: {}]
  %s4 = inlined_call_operand.vmem [shape: f32[1,4], index: 4, kind: input, shape index: {}]
  %s5 = inlined_call_operand.vmem [shape: f32[2,4,256], index: 5, kind: output, shape index: {}]
  %s6 = sld [smem:[#allocation0]]
  $region30: #{se_module.1} parent=0
    _
  %s8 = ssub.s32 1, %s6
  %s9 = scalar_select 0, %s8, %s6
  // Predicated region
  $region2: #{se_module.1} parent=0 // pred_check
    _
  $region3: #{se_module.1} parent=0 // pred_check_branch
    %11 = sbr.rel (0) target = $region5
  $region4: #{se_module.1} parent=0 // pred_region
    _
  $region5: #{se_module.1} parent=0 // pred_fallthru
    _
  // Predicated region
  $region6: #{se_module.1} parent=0 // pred_check
    _
  $region7: #{se_module.1} parent=0 // pred_check_branch
    %13 = sbr.rel (0) target = $region9
  $region8: #{se_module.1} parent=0 // pred_region
    _
  $region9: #{se_module.1} parent=0 // pred_fallthru
    _
  // Predicated region
  $region10: #{se_module.1} parent=0 // pred_check
    _
  $region11: #{se_module.1} parent=0 // pred_check_branch
    %15 = sbr.rel (0) target = $region13
  $region12: #{se_module.1} parent=0 // pred_region
    _
  $region13: #{se_module.1} parent=0 // pred_fallthru
    _
  // Predicated region
  $region14: #{se_module.1} parent=0 // pred_check
    _
  $region15: #{se_module.1} parent=0 // pred_check_branch
    %17 = sbr.rel (0) target = $region17
  $region16: #{se_module.1} parent=0 // pred_region
    _
  $region17: #{se_module.1} parent=0 // pred_fallthru
    _
  // Predicated region
  $region18: #{se_module.1} parent=0 // pred_check
    _
  $region19: #{se_module.1} parent=0 // pred_check_branch
    %19 = sbr.rel (0) target = $region21
  $region20: #{se_module.1} parent=0 // pred_region
    _
  $region21: #{se_module.1} parent=0 // pred_fallthru
    _
  %v20 = vld [vmem:[%s0] sm:$0xff]
  %v21 = vld [vmem:[%s0 + $0x8] sm:$0xff]
  %v24 = vcombine.high %v20, %v20
  %v25 = vcombine.high %v21, %v21
  %vm28 = vcmask 1043456
  %v29 = vsel %vm28, %v20, 0.0
  %v30 = vsel %vm28, %v24, 0.0
  %v31 = vadd.f32 %v29, %v30
  %32 = vadd.xlane.f32.xlu0 %v31
  %v33 = vpop.xlane.xlu0 %32
  %v34 = vsel %vm28, %v21, 0.0
  %v35 = vsel %vm28, %v25, 0.0
  %v36 = vadd.f32 %v34, %v35
  %37 = vadd.xlane.f32.xlu0 %v36
  %v38 = vpop.xlane.xlu0 %37
  %v39 = vmul.f32 %v33, 0.00390625
  %v40 = vmul.f32 %v38, 0.00390625
  %v41 = vld [vmem:[%s1] sm:$0xf]
  %v42 = vmul.f32 %v39, %v41
  %v43 = vmul.f32 %v40, %v41
  %vm44 = vcmask 11264
  %v45 = vsel %vm44, %v42, 0.0
  %v46 = vrot.slane %v45, 4
  %v47 = vadd.f32 %v45, %v46
  %v48 = vrot.slane %v47, 2
  %v49 = vadd.f32 %v47, %v48
  %v50 = vrot.slane %v49, 1
  %v51 = vadd.f32 %v49, %v50
  %v52 = vsel %vm44, %v43, 0.0
  %v53 = vrot.slane %v52, 4
  %v54 = vadd.f32 %v52, %v53
  %v55 = vrot.slane %v54, 2
  %v56 = vadd.f32 %v54, %v55
  %v57 = vrot.slane %v56, 1
  %v58 = vadd.f32 %v56, %v57
  %v59 = vld [vmem:[%s2] sm:$0x1]
  %v61 = vlaneseq
  %v62 = vshrl.u32 %v61, 7
  %v63 = vsub.s32 0, %v62
  %v64 = vrot.slane %v59, %v63
  %v66 = vadd.f32 %v51, %v64
  %v67 = vadd.f32 %v58, %v64
  %v68 = vmax.f32 %v66, 0.0
  %v69 = vmax.f32 %v67, 0.0
  %v70 = vld [vmem:[%s3] sm:$0xf]
  %v71 = vlaneseq
  %v72 = vshrl.u32 %v71, 7
  %v73 = vsub.s32 0, %v72
  %v74 = vrot.slane %v68, %v73
  %v75 = vlaneseq
  %v76 = vshrl.u32 %v75, 7
  %v77 = vsub.s32 0, %v76
  %v78 = vrot.slane %v69, %v77
  %v79 = vmul.f32 %v74, %v70
  %v80 = vmul.f32 %v78, %v70
  %v81 = vsel %vm44, %v79, 0.0
  %82 = vadd.xlane.f32.xlu0 %v81
  %v83 = vpop.xlane.xlu0 %82
  %v84 = vsel %vm44, %v80, 0.0
  %85 = vadd.xlane.f32.xlu0 %v84
  %v86 = vpop.xlane.xlu0 %85
  %v87 = vld [vmem:[%s4] sm:$0x1]
  %v89 = vlaneseq
  %v90 = vshrl.u32 %v89, 7
  %v91 = vsub.s32 0, %v90
  %v92 = vrot.slane %v87, %v91
  %94 = vbcast.lane.b32.xlu0 %v92, 256
  %v95 = vpop.permute.xlu0 %94
  %v97 = vadd.f32 %v83, %v95
  %v98 = vadd.f32 %v86, %v95
  %v99 = vxor.u32 %v97, 2147483648
  %v100 = vxor.u32 %v98, 2147483648
  %v101 = vmul.f32 %v99, 1.442695
  %v102 = vpow.pop %v101
  %v103 = vmul.f32 %v100, 1.442695
  %v104 = vpow.pop %v103
  %v105 = vadd.f32 %v102, 1.0
  %v106 = vadd.f32 %v104, 1.0
  %v107 = vrcp.pop %v105
  %v108 = vmul.f32 1.0, %v107
  %v109 = vrcp.pop %v106
  %v110 = vmul.f32 1.0, %v109
  %112 = vset.pattern.permute.xlu0 0
  %113 = vperm.xlu0 %112, %v108
  %v114 = vpop.permute.xlu0 %113
  %116 = vset.pattern.permute.xlu0 0
  %117 = vperm.xlu0 %116, %v110
  %v118 = vpop.permute.xlu0 %117
  %v120 = vunpack.c.l.s4 839922192
  %v121 = vunpack.c.0.s8 %v120
  %v122 = vlaneseq
  %v123 = vshrl.u32 %v122, 7
  %v124 = vsub.s32 %v121, %v123
  %v125 = vrot.slane %v114, %v124
  %v127 = vunpack.c.l.s4 839922192
  %v128 = vunpack.c.0.s8 %v127
  %v129 = vlaneseq
  %v130 = vshrl.u32 %v129, 7
  %v131 = vsub.s32 %v128, %v130
  %v132 = vrot.slane %v118, %v131
  %v135 = vmul.f32 %v20, %v125
  %v136 = vmul.f32 %v21, %v132
  %137 = vst [vmem:[%s5] sm:$0xff] %v135
  %138 = vst [vmem:[%s5 + $0x8] sm:$0xff] %v136
  // Predicated region
  $region22: #{se_module.1} parent=0 // pred_check
    _
  $region23: #{se_module.1} parent=0 // pred_check_branch
    %140 = sbr.rel (0) target = $region25
  $region24: #{se_module.1} parent=0 // pred_region
    _
  $region25: #{se_module.1} parent=0 // pred_fallthru
    _
  // Predicated region
  $region26: #{se_module.1} parent=0 // pred_check
    _
  $region27: #{se_module.1} parent=0 // pred_check_branch
    %142 = sbr.rel (0) target = $region29
  $region28: #{se_module.1} parent=0 // pred_region
    _
  $region29: #{se_module.1} parent=0 // pred_fallthru
    _

</llo_original>
